<compile_context>
chip_gen: v5e
topology: v5e:2x2
jax: 0.10.0
libtpu: 0.0.40
codegen_flags: <defaults>
</compile_context>

<pallas_src>
import functools

import jax
import jax.numpy as jnp
from jax import lax
from jax.experimental import pallas as pl
from jax.experimental.pallas import tpu as pltpu

R1 = 0.001
R2 = 0.001
EPS = 1e-9

# Leading "parallel" grid axis: sharded across TensorCores on v7x (2 TCs),
# plain sequential iteration on v5e/v6e (1 TC) -- harmless either way.
NCORES = 2


def _round_up(n, k):
    return ((n + k - 1) // k) * k


def _gram_kernel(x_ref, y_ref, gxx_ref, gyy_ref, gxy_ref, sx_ref, sy_ref):
    """Per-core partial Grams + column sums, accumulated in the output refs."""
    k = pl.program_id(1)

    @pl.when(k == 0)
    def _():
        gxx_ref[...] = jnp.zeros_like(gxx_ref)
        gyy_ref[...] = jnp.zeros_like(gyy_ref)
        gxy_ref[...] = jnp.zeros_like(gxy_ref)
        sx_ref[...] = jnp.zeros_like(sx_ref)
        sy_ref[...] = jnp.zeros_like(sy_ref)

    x = x_ref[...]
    y = y_ref[...]
    # Contract the sample (sublane) axis: A^T B on the MXU, f32 accumulation.
    dn = (((0,), (0,)), ((), ()))
    gxx_ref[...] += lax.dot_general(x, x, dn, preferred_element_type=jnp.float32)
    gyy_ref[...] += lax.dot_general(y, y, dn, preferred_element_type=jnp.float32)
    gxy_ref[...] += lax.dot_general(x, y, dn, preferred_element_type=jnp.float32)
    # Column sums for the mean correction (cheap sublane reduce; not the
    # binding slot for these shapes).
    sx_ref[...] += jnp.sum(x.astype(jnp.float32), axis=0, keepdims=True)
    sy_ref[...] += jnp.sum(y.astype(jnp.float32), axis=0, keepdims=True)


def _tmat_kernel(v1_ref, d1_ref, v2_ref, d2_ref, s12_ref,
                 tt_reg_ref, diag_ref, *, r1, eps):
    v1 = v1_ref[...]          # (o1, o1) eigenvectors of SigmaHat11
    d1 = d1_ref[...]          # (1, o1)  eigenvalues of SigmaHat11
    v2 = v2_ref[...]          # (o2, o2)
    d2 = d2_ref[...]          # (1, o2)
    s12 = s12_ref[...]        # (o1, o2)

    # torch drops eigenpairs with D <= eps; zeroing their D^{-1/2}
    # contribution in V diag(D^{-1/2}) V^T is mathematically identical.
    inv_sd1 = jnp.where(d1 > eps, lax.rsqrt(jnp.maximum(d1, eps)), 0.0)
    inv_sd2 = jnp.where(d2 > eps, lax.rsqrt(jnp.maximum(d2, eps)), 0.0)

    # (V * d^{-1/2}) @ V^T without materializing the transpose:
    # contract dim 1 of both operands.
    dn_bt = (((1,), (1,)), ((), ()))
    r11 = lax.dot_general(v1 * inv_sd1, v1, dn_bt,
                          preferred_element_type=jnp.float32)
    r22 = lax.dot_general(v2 * inv_sd2, v2, dn_bt,
                          preferred_element_type=jnp.float32)

    tval = jnp.dot(jnp.dot(r11, s12, preferred_element_type=jnp.float32),
                   r22, preferred_element_type=jnp.float32)        # (o1, o2)

    # Tval^T Tval (contract dim 0 of both).
    dn_tn = (((0,), (0,)), ((), ()))
    tt = lax.dot_general(tval, tval, dn_tn,
                         preferred_element_type=jnp.float32)        # (o2, o2)
    row = lax.broadcasted_iota(jnp.int32, tt.shape, 0)
    col = lax.broadcasted_iota(jnp.int32, tt.shape, 1)
    tt_reg_ref[...] = tt + jnp.where(row == col, jnp.float32(r1),
                                     jnp.float32(0.0))
    # diag(Tval^T Tval) as column norms -> trace(sqrt(.)) path only needs this.
    diag_ref[...] = jnp.sum(tval * tval, axis=0, keepdims=True)     # (1, o2)


def cca_loss(x, y, outdim_size, use_all_singular_values=False, block_m=4096):
    m, o1 = x.shape
    m2, o2 = y.shape
    assert m == m2
    itemsize = jnp.dtype(x.dtype).itemsize

    # --- Tile / padding policy (derived, not hardcoded) ---------------------
    # Cap the tile so double-buffered input streams stay well inside v7x's
    # 64 MiB VMEM; v5e/v6e (128 MiB) get the same safe budget.
    row_bytes = 2 * 2 * (o1 + o2) * itemsize      # 2 inputs x 2 pipeline bufs
    vmem_rows_cap = max(8, (40 << 20) // max(row_bytes, 1))
    block_m = max(8, min(block_m, vmem_rows_cap))
    # Balance tiles instead of round_up(m, tm) (which could nearly double the
    # streamed bytes when m is just above a multiple of tm), and make the tile
    # count a multiple of the core axis.
    n_tiles = max(1, pl.cdiv(m, block_m))
    n_tiles = pl.cdiv(n_tiles, NCORES) * NCORES
    tm = _round_up(pl.cdiv(m, n_tiles), 8)
    m_pad = n_tiles * tm
    steps = n_tiles // NCORES
    if m_pad != m:
        # zero rows contribute nothing to the Grams or the column sums
        x = jnp.pad(x, ((0, m_pad - m), (0, 0)))
        y = jnp.pad(y, ((0, m_pad - m), (0, 0)))

    out_bytes = 4 * (o1 * o1 + o2 * o2 + o1 * o2 + o1 + o2)
    vmem_limit = int(min(max(row_bytes * tm + 2 * out_bytes + (8 << 20),
                             32 << 20), 64 << 20))

    cost = pl.CostEstimate(
        flops=2 * m_pad * (o1 * o1 + o2 * o2 + o1 * o2),
        transcendentals=0,
        bytes_accessed=m_pad * (o1 + o2) * itemsize + NCORES * out_bytes,
    )

    # --- Kernel 1: streaming partial covariances over the sample axis -------
    # TODO(synk): optionally stream bf16 inputs (half the HBM bytes) once
    # numerically validated; f32 kept here to match the torch reference.
    gxx, gyy, gxy, sx, sy = pl.pallas_call(
        _gram_kernel,
        out_shape=(jax.ShapeDtypeStruct((NCORES, o1, o1), jnp.float32),
                   jax.ShapeDtypeStruct((NCORES, o2, o2), jnp.float32),
                   jax.ShapeDtypeStruct((NCORES, o1, o2), jnp.float32),
                   jax.ShapeDtypeStruct((NCORES, 1, o1), jnp.float32),
                   jax.ShapeDtypeStruct((NCORES, 1, o2), jnp.float32)),
        grid_spec=pltpu.PrefetchScalarGridSpec(
            num_scalar_prefetch=0,
            grid=(NCORES, steps),
            in_specs=[
                pl.BlockSpec((tm, o1), lambda c, k, _s=steps: (c * _s + k, 0)),
                pl.BlockSpec((tm, o2), lambda c, k, _s=steps: (c * _s + k, 0)),
            ],
            out_specs=(
                pl.BlockSpec((None, o1, o1), lambda c, k: (c, 0, 0)),
                pl.BlockSpec((None, o2, o2), lambda c, k: (c, 0, 0)),
                pl.BlockSpec((None, o1, o2), lambda c, k: (c, 0, 0)),
                pl.BlockSpec((None, 1, o1), lambda c, k: (c, 0, 0)),
                pl.BlockSpec((None, 1, o2), lambda c, k: (c, 0, 0)),
            ),
        ),
        compiler_params=pltpu.CompilerParams(
            dimension_semantics=("parallel", "arbitrary"),
            vmem_limit_bytes=vmem_limit),
        cost_estimate=cost,
    )(x, y)

    # --- Tiny finalize in plain JAX (O(o^2)): sum partials, center, +r*I ----
    gxx = jnp.sum(gxx, axis=0)
    gyy = jnp.sum(gyy, axis=0)
    gxy = jnp.sum(gxy, axis=0)
    sx = jnp.sum(sx, axis=0)                        # (1, o1) column sums
    sy = jnp.sum(sy, axis=0)                        # (1, o2)

    # NOTE: sum-form centering (G - s s^T / m) is algebraically identical to
    # centering first; f32 accumulation keeps cancellation benign for roughly
    # zero-mean activations.
    inv_m1 = 1.0 / (m - 1)
    s11 = (gxx - (sx.T @ sx) / m) * inv_m1 + R1 * jnp.eye(o1, dtype=jnp.float32)
    s22 = (gyy - (sy.T @ sy) / m) * inv_m1 + R2 * jnp.eye(o2, dtype=jnp.float32)
    s12 = (gxy - (sx.T @ sy) / m) * inv_m1

    # TODO(synk): torch.linalg.eigh (symmetric eigendecomposition) has no
    # clean Pallas equivalent; computed with jnp.linalg.eigh outside kernels.
    d1, v1 = jnp.linalg.eigh(s11)
    d2, v2 = jnp.linalg.eigh(s22)

    # --- Kernel 2: T-matrix construction (tiny, single block) ---------------
    # TODO(synk): for very large o1/o2 (~2k) the all-resident VMEM footprint
    # would exceed v7x's 64 MiB; block it (or fall back to XLA) in that regime.
    vmem = pl.BlockSpec(memory_space=pltpu.MemorySpace.VMEM)
    tt_reg, tt_diag = pl.pallas_call(
        functools.partial(_tmat_kernel, r1=R1, eps=EPS),
        out_shape=(jax.ShapeDtypeStruct((o2, o2), jnp.float32),
                   jax.ShapeDtypeStruct((1, o2), jnp.float32)),
        in_specs=[vmem] * 5,
        out_specs=(vmem, vmem),
    )(v1, d1.reshape(1, o1), v2, d2.reshape(1, o2), s12)

    if use_all_singular_values:
        # torch: trace(elementwise sqrt(Tval^T Tval)) == sum(sqrt(diag))
        corr = jnp.sum(jnp.sqrt(tt_diag))
    else:
        # TODO(synk): top_k / eigh stay in plain JAX (no Pallas equivalent).
        u, _ = jnp.linalg.eigh(tt_reg)
        u = jnp.where(u > EPS, u, EPS)
        u_top = lax.top_k(u, outdim_size)[0]
        corr = jnp.sum(jnp.sqrt(u_top))
    return -corr


def _reference_cca_loss(x, y, outdim_size, use_all_singular_values):
    """Pure-JAX mirror of the PyTorch forward, for correctness checking."""
    m, o1 = x.shape
    o2 = y.shape[1]
    xb = x - x.mean(axis=0, keepdims=True)
    yb = y - y.mean(axis=0, keepdims=True)
    s12 = (xb.T @ yb) / (m - 1)
    s11 = (xb.T @ xb) / (m - 1) + R1 * jnp.eye(o1, dtype=jnp.float32)
    s22 = (yb.T @ yb) / (m - 1) + R2 * jnp.eye(o2, dtype=jnp.float32)
    d1, v1 = jnp.linalg.eigh(s11)
    d2, v2 = jnp.linalg.eigh(s22)
    inv1 = jnp.where(d1 > EPS, d1 ** -0.5, 0.0)
    inv2 = jnp.where(d2 > EPS, d2 ** -0.5, 0.0)
    r11 = (v1 * inv1) @ v1.T
    r22 = (v2 * inv2) @ v2.T
    tval = r11 @ s12 @ r22
    tt = tval.T @ tval
    if use_all_singular_values:
        corr = jnp.sum(jnp.sqrt(jnp.diag(tt)))
    else:
        u, _ = jnp.linalg.eigh(tt + R1 * jnp.eye(o2, dtype=jnp.float32))
        u = jnp.where(u > EPS, u, EPS)
        corr = jnp.sum(jnp.sqrt(lax.top_k(u, outdim_size)[0]))
    return -corr


if __name__ == "__main__":
    key = jax.random.PRNGKey(0)
    kx, ky = jax.random.split(key)
    m, o1, o2 = 256, 32, 32
    outdim_size = 8
    x = jax.random.normal(kx, (m, o1), dtype=jnp.float32)
    y = 0.5 * x + 0.5 * jax.random.normal(ky, (m, o2), dtype=jnp.float32)

    # Multi-step streaming path (2 cores x 2 sample tiles of 64 rows).
    loss = cca_loss(x, y, outdim_size, use_all_singular_values=False, block_m=64)
    loss = jax.block_until_ready(loss)
    ref = _reference_cca_loss(x, y, outdim_size, False)
    assert jnp.isfinite(loss), f"non-finite loss: {loss}"
    assert jnp.allclose(loss, ref, rtol=5e-3, atol=5e-3), (loss, ref)

    # Single-step-per-core path + all-singular-values branch.
    loss_all = cca_loss(x, y, outdim_size, use_all_singular_values=True)
    loss_all = jax.block_until_ready(loss_all)
    ref_all = _reference_cca_loss(x, y, outdim_size, True)
    assert jnp.isfinite(loss_all), f"non-finite loss: {loss_all}"
    assert jnp.allclose(loss_all, ref_all, rtol=5e-3, atol=5e-3), (loss_all, ref_all)

    print("KERNEL_OK")
</pallas_src>

<mosaic_0001>
module attributes {stable_mosaic.version = 11 : i64} {
  func.func @_gram_kernel(%arg0: i32, %arg1: i32, %arg2: memref<64x32xf32, #tpu.memory_space<vmem>>, %arg3: memref<64x32xf32, #tpu.memory_space<vmem>>, %arg4: memref<1x32x32xf32, #tpu.memory_space<vmem>>, %arg5: memref<1x32x32xf32, #tpu.memory_space<vmem>>, %arg6: memref<1x32x32xf32, #tpu.memory_space<vmem>>, %arg7: memref<1x1x32xf32, #tpu.memory_space<vmem>>, %arg8: memref<1x1x32xf32, #tpu.memory_space<vmem>>) attributes {dimension_semantics = [#tpu.dimension_semantics<parallel>, #tpu.dimension_semantics<arbitrary>], iteration_bounds = array<i64: 2, 2>, scalar_prefetch = 0 : i64, scratch_operands = 0 : i64, tpu.core_type = #tpu.core_type<tc>, window_params = [{transform_indices = @transform_0, window_bounds = array<i64: 64, 32>}, {transform_indices = @transform_1, window_bounds = array<i64: 64, 32>}, {transform_indices = @transform_2, window_bounds = array<i64: 1, 32, 32>}, {transform_indices = @transform_3, window_bounds = array<i64: 1, 32, 32>}, {transform_indices = @transform_4, window_bounds = array<i64: 1, 32, 32>}, {transform_indices = @transform_5, window_bounds = array<i64: 1, 1, 32>}, {transform_indices = @transform_6, window_bounds = array<i64: 1, 1, 32>}]} {
    %c0_i32 = arith.constant 0 : i32
    %0 = arith.cmpi eq, %arg1, %c0_i32 : i32
    %1 = arith.extui %0 : i1 to i32
    %c0_i32_0 = arith.constant 0 : i32
    %2 = arith.cmpi ne, %1, %c0_i32_0 : i32
    scf.if %2 {
      %cst_38 = arith.constant 0.000000e+00 : f32
      %42 = vector.broadcast %cst_38 : f32 to vector<32x32xf32>
      %c0_39 = arith.constant 0 : index
      %c0_40 = arith.constant 0 : index
      %c0_41 = arith.constant 0 : index
      %43 = vector.load %arg4[%c0_39, %c0_40, %c0_41] : memref<1x32x32xf32, #tpu.memory_space<vmem>>, vector<1x32x32xf32>
      %44 = vector.shape_cast %43 : vector<1x32x32xf32> to vector<32x32xf32>
      %45 = vector.shape_cast %42 : vector<32x32xf32> to vector<1x32x32xf32>
      tpu.vector_store %arg4[%c0_39, %c0_40, %c0_41], %45 {strides = array<i32>} : memref<1x32x32xf32, #tpu.memory_space<vmem>>, vector<1x32x32xf32>,
      %cst_42 = arith.constant 0.000000e+00 : f32
      %46 = vector.broadcast %cst_42 : f32 to vector<32x32xf32>
      %c0_43 = arith.constant 0 : index
      %c0_44 = arith.constant 0 : index
      %c0_45 = arith.constant 0 : index
      %47 = vector.load %arg5[%c0_43, %c0_44, %c0_45] : memref<1x32x32xf32, #tpu.memory_space<vmem>>, vector<1x32x32xf32>
      %48 = vector.shape_cast %47 : vector<1x32x32xf32> to vector<32x32xf32>
      %49 = vector.shape_cast %46 : vector<32x32xf32> to vector<1x32x32xf32>
      tpu.vector_store %arg5[%c0_43, %c0_44, %c0_45], %49 {strides = array<i32>} : memref<1x32x32xf32, #tpu.memory_space<vmem>>, vector<1x32x32xf32>,
      %cst_46 = arith.constant 0.000000e+00 : f32
      %50 = vector.broadcast %cst_46 : f32 to vector<32x32xf32>
      %c0_47 = arith.constant 0 : index
      %c0_48 = arith.constant 0 : index
      %c0_49 = arith.constant 0 : index
      %51 = vector.load %arg6[%c0_47, %c0_48, %c0_49] : memref<1x32x32xf32, #tpu.memory_space<vmem>>, vector<1x32x32xf32>
      %52 = vector.shape_cast %51 : vector<1x32x32xf32> to vector<32x32xf32>
      %53 = vector.shape_cast %50 : vector<32x32xf32> to vector<1x32x32xf32>
      tpu.vector_store %arg6[%c0_47, %c0_48, %c0_49], %53 {strides = array<i32>} : memref<1x32x32xf32, #tpu.memory_space<vmem>>, vector<1x32x32xf32>,
      %cst_50 = arith.constant 0.000000e+00 : f32
      %54 = vector.broadcast %cst_50 : f32 to vector<1x32xf32>
      %c0_51 = arith.constant 0 : index
      %c0_52 = arith.constant 0 : index
      %c0_53 = arith.constant 0 : index
      %55 = vector.load %arg7[%c0_51, %c0_52, %c0_53] : memref<1x1x32xf32, #tpu.memory_space<vmem>>, vector<1x1x32xf32>
      %56 = vector.shape_cast %55 : vector<1x1x32xf32> to vector<1x32xf32>
      %57 = vector.shape_cast %54 : vector<1x32xf32> to vector<1x1x32xf32>
      tpu.vector_store %arg7[%c0_51, %c0_52, %c0_53], %57 {strides = array<i32>} : memref<1x1x32xf32, #tpu.memory_space<vmem>>, vector<1x1x32xf32>,
      %cst_54 = arith.constant 0.000000e+00 : f32
      %58 = vector.broadcast %cst_54 : f32 to vector<1x32xf32>
      %c0_55 = arith.constant 0 : index
      %c0_56 = arith.constant 0 : index
      %c0_57 = arith.constant 0 : index
      %59 = vector.load %arg8[%c0_55, %c0_56, %c0_57] : memref<1x1x32xf32, #tpu.memory_space<vmem>>, vector<1x1x32xf32>
      %60 = vector.shape_cast %59 : vector<1x1x32xf32> to vector<1x32xf32>
      %61 = vector.shape_cast %58 : vector<1x32xf32> to vector<1x1x32xf32>
      tpu.vector_store %arg8[%c0_55, %c0_56, %c0_57], %61 {strides = array<i32>} : memref<1x1x32xf32, #tpu.memory_space<vmem>>, vector<1x1x32xf32>,
    } else {
    }
    %c0 = arith.constant 0 : index
    %c0_1 = arith.constant 0 : index
    %3 = vector.load %arg2[%c0, %c0_1] : memref<64x32xf32, #tpu.memory_space<vmem>>, vector<64x32xf32>
    %c0_2 = arith.constant 0 : index
    %c0_3 = arith.constant 0 : index
    %4 = vector.load %arg3[%c0_2, %c0_3] : memref<64x32xf32, #tpu.memory_space<vmem>>, vector<64x32xf32>
    %c0_4 = arith.constant 0 : index
    %c0_5 = arith.constant 0 : index
    %c0_6 = arith.constant 0 : index
    %5 = vector.load %arg4[%c0_4, %c0_5, %c0_6] : memref<1x32x32xf32, #tpu.memory_space<vmem>>, vector<1x32x32xf32>
    %6 = vector.shape_cast %5 : vector<1x32x32xf32> to vector<32x32xf32>
    %cst = arith.constant dense<0.000000e+00> : vector<32x32xf32>
    %7 = tpu.matmul %3, %3, %cst {dimension_numbers = #tpu.dot_dimension_numbers<[0], [0], [1], [1], [0, 1, 1, 1], [], []>} : vector<64x32xf32>, vector<64x32xf32>, vector<32x32xf32> -> vector<32x32xf32>
    %8 = arith.addf %6, %7 : vector<32x32xf32>
    %c0_7 = arith.constant 0 : index
    %c0_8 = arith.constant 0 : index
    %c0_9 = arith.constant 0 : index
    %9 = vector.load %arg4[%c0_7, %c0_8, %c0_9] : memref<1x32x32xf32, #tpu.memory_space<vmem>>, vector<1x32x32xf32>
    %10 = vector.shape_cast %9 : vector<1x32x32xf32> to vector<32x32xf32>
    %11 = vector.shape_cast %8 : vector<32x32xf32> to vector<1x32x32xf32>
    tpu.vector_store %arg4[%c0_7, %c0_8, %c0_9], %11 {strides = array<i32>} : memref<1x32x32xf32, #tpu.memory_space<vmem>>, vector<1x32x32xf32>,
    %c0_10 = arith.constant 0 : index
    %c0_11 = arith.constant 0 : index
    %c0_12 = arith.constant 0 : index
    %12 = vector.load %arg5[%c0_10, %c0_11, %c0_12] : memref<1x32x32xf32, #tpu.memory_space<vmem>>, vector<1x32x32xf32>
    %13 = vector.shape_cast %12 : vector<1x32x32xf32> to vector<32x32xf32>
    %cst_13 = arith.constant dense<0.000000e+00> : vector<32x32xf32>
    %14 = tpu.matmul %4, %4, %cst_13 {dimension_numbers = #tpu.dot_dimension_numbers<[0], [0], [1], [1], [0, 1, 1, 1], [], []>} : vector<64x32xf32>, vector<64x32xf32>, vector<32x32xf32> -> vector<32x32xf32>
    %15 = arith.addf %13, %14 : vector<32x32xf32>
    %c0_14 = arith.constant 0 : index
    %c0_15 = arith.constant 0 : index
    %c0_16 = arith.constant 0 : index
    %16 = vector.load %arg5[%c0_14, %c0_15, %c0_16] : memref<1x32x32xf32, #tpu.memory_space<vmem>>, vector<1x32x32xf32>
    %17 = vector.shape_cast %16 : vector<1x32x32xf32> to vector<32x32xf32>
    %18 = vector.shape_cast %15 : vector<32x32xf32> to vector<1x32x32xf32>
    tpu.vector_store %arg5[%c0_14, %c0_15, %c0_16], %18 {strides = array<i32>} : memref<1x32x32xf32, #tpu.memory_space<vmem>>, vector<1x32x32xf32>,
    %c0_17 = arith.constant 0 : index
    %c0_18 = arith.constant 0 : index
    %c0_19 = arith.constant 0 : index
    %19 = vector.load %arg6[%c0_17, %c0_18, %c0_19] : memref<1x32x32xf32, #tpu.memory_space<vmem>>, vector<1x32x32xf32>
    %20 = vector.shape_cast %19 : vector<1x32x32xf32> to vector<32x32xf32>
    %cst_20 = arith.constant dense<0.000000e+00> : vector<32x32xf32>
    %21 = tpu.matmul %3, %4, %cst_20 {dimension_numbers = #tpu.dot_dimension_numbers<[0], [0], [1], [1], [0, 1, 1, 1], [], []>} : vector<64x32xf32>, vector<64x32xf32>, vector<32x32xf32> -> vector<32x32xf32>
    %22 = arith.addf %20, %21 : vector<32x32xf32>
    %c0_21 = arith.constant 0 : index
    %c0_22 = arith.constant 0 : index
    %c0_23 = arith.constant 0 : index
    %23 = vector.load %arg6[%c0_21, %c0_22, %c0_23] : memref<1x32x32xf32, #tpu.memory_space<vmem>>, vector<1x32x32xf32>
    %24 = vector.shape_cast %23 : vector<1x32x32xf32> to vector<32x32xf32>
    %25 = vector.shape_cast %22 : vector<32x32xf32> to vector<1x32x32xf32>
    tpu.vector_store %arg6[%c0_21, %c0_22, %c0_23], %25 {strides = array<i32>} : memref<1x32x32xf32, #tpu.memory_space<vmem>>, vector<1x32x32xf32>,
    %c0_24 = arith.constant 0 : index
    %c0_25 = arith.constant 0 : index
    %c0_26 = arith.constant 0 : index
    %26 = vector.load %arg7[%c0_24, %c0_25, %c0_26] : memref<1x1x32xf32, #tpu.memory_space<vmem>>, vector<1x1x32xf32>
    %27 = vector.shape_cast %26 : vector<1x1x32xf32> to vector<1x32xf32>
    %cst_27 = arith.constant dense<0.000000e+00> : vector<32xf32>
    %28 = vector.multi_reduction <add>, %3, %cst_27 [0] : vector<64x32xf32> to vector<32xf32>
    %29 = vector.shape_cast %28 : vector<32xf32> to vector<1x32xf32>
    %30 = arith.addf %27, %29 : vector<1x32xf32>
    %c0_28 = arith.constant 0 : index
    %c0_29 = arith.constant 0 : index
    %c0_30 = arith.constant 0 : index
    %31 = vector.load %arg7[%c0_28, %c0_29, %c0_30] : memref<1x1x32xf32, #tpu.memory_space<vmem>>, vector<1x1x32xf32>
    %32 = vector.shape_cast %31 : vector<1x1x32xf32> to vector<1x32xf32>
    %33 = vector.shape_cast %30 : vector<1x32xf32> to vector<1x1x32xf32>
    tpu.vector_store %arg7[%c0_28, %c0_29, %c0_30], %33 {strides = array<i32>} : memref<1x1x32xf32, #tpu.memory_space<vmem>>, vector<1x1x32xf32>,
    %c0_31 = arith.constant 0 : index
    %c0_32 = arith.constant 0 : index
    %c0_33 = arith.constant 0 : index
    %34 = vector.load %arg8[%c0_31, %c0_32, %c0_33] : memref<1x1x32xf32, #tpu.memory_space<vmem>>, vector<1x1x32xf32>
    %35 = vector.shape_cast %34 : vector<1x1x32xf32> to vector<1x32xf32>
    %cst_34 = arith.constant dense<0.000000e+00> : vector<32xf32>
    %36 = vector.multi_reduction <add>, %4, %cst_34 [0] : vector<64x32xf32> to vector<32xf32>
    %37 = vector.shape_cast %36 : vector<32xf32> to vector<1x32xf32>
    %38 = arith.addf %35, %37 : vector<1x32xf32>
    %c0_35 = arith.constant 0 : index
    %c0_36 = arith.constant 0 : index
    %c0_37 = arith.constant 0 : index
    %39 = vector.load %arg8[%c0_35, %c0_36, %c0_37] : memref<1x1x32xf32, #tpu.memory_space<vmem>>, vector<1x1x32xf32>
    %40 = vector.shape_cast %39 : vector<1x1x32xf32> to vector<1x32xf32>
    %41 = vector.shape_cast %38 : vector<1x32xf32> to vector<1x1x32xf32>
    tpu.vector_store %arg8[%c0_35, %c0_36, %c0_37], %41 {strides = array<i32>} : memref<1x1x32xf32, #tpu.memory_space<vmem>>, vector<1x1x32xf32>,
    return
  }
  func.func @transform_0(%arg0: i32, %arg1: i32) -> (i32, i32) {
    %c2_i32 = arith.constant 2 : i32
    %0 = arith.muli %arg0, %c2_i32 : i32
    %1 = arith.addi %0, %arg1 : i32
    %c0_i32 = arith.constant 0 : i32
    %c0_i32_0 = arith.constant 0 : i32
    return %1, %c0_i32 : i32, i32
  }
  func.func @transform_1(%arg0: i32, %arg1: i32) -> (i32, i32) {
    %c2_i32 = arith.constant 2 : i32
    %0 = arith.muli %arg0, %c2_i32 : i32
    %1 = arith.addi %0, %arg1 : i32
    %c0_i32 = arith.constant 0 : i32
    %c0_i32_0 = arith.constant 0 : i32
    return %1, %c0_i32 : i32, i32
  }
  func.func @transform_2(%arg0: i32, %arg1: i32) -> (i32, i32, i32) {
    %c0_i32 = arith.constant 0 : i32
    %c0_i32_0 = arith.constant 0 : i32
    %c0_i32_1 = arith.constant 0 : i32
    return %arg0, %c0_i32, %c0_i32_0 : i32, i32, i32
  }
  func.func @transform_3(%arg0: i32, %arg1: i32) -> (i32, i32, i32) {
    %c0_i32 = arith.constant 0 : i32
    %c0_i32_0 = arith.constant 0 : i32
    %c0_i32_1 = arith.constant 0 : i32
    return %arg0, %c0_i32, %c0_i32_0 : i32, i32, i32
  }
  func.func @transform_4(%arg0: i32, %arg1: i32) -> (i32, i32, i32) {
    %c0_i32 = arith.constant 0 : i32
    %c0_i32_0 = arith.constant 0 : i32
    %c0_i32_1 = arith.constant 0 : i32
    return %arg0, %c0_i32, %c0_i32_0 : i32, i32, i32
  }
  func.func @transform_5(%arg0: i32, %arg1: i32) -> (i32, i32, i32) {
    %c0_i32 = arith.constant 0 : i32
    %c0_i32_0 = arith.constant 0 : i32
    %c0_i32_1 = arith.constant 0 : i32
    return %arg0, %c0_i32, %c0_i32_0 : i32, i32, i32
  }
  func.func @transform_6(%arg0: i32, %arg1: i32) -> (i32, i32, i32) {
    %c0_i32 = arith.constant 0 : i32
    %c0_i32_0 = arith.constant 0 : i32
    %c0_i32_1 = arith.constant 0 : i32
    return %arg0, %c0_i32, %c0_i32_0 : i32, i32, i32
  }
}

</mosaic_0001>

<llo_original>
// kernel: tpu_custom_call.1
$region0: #{tpu_custom_call.1}
  #allocation0 [shape = 'u32[]', space=smem, size = 0x4, offset = 0x4, fixed_abs, tag = 'smem constant byte address 0x4 - core index']
  #allocation1 [shape = 'u32[72,128]{1,0:T(1,128)}', space=vmem, size = 0x9000, scoped, tag = 'internal scratch']
  %s0 = inlined_call_operand.vmem [shape: f32[256,32], index: 0, kind: input, shape index: {}]
  %s1 = inlined_call_operand.vmem [shape: f32[256,32], index: 1, kind: input, shape index: {}]
  %s2 = inlined_call_operand.hbm [shape: f32[2,32,32], index: 2, kind: output, shape index: {0}]
  %s3 = inlined_call_operand.hbm [shape: f32[2,32,32], index: 3, kind: output, shape index: {1}]
  %s4 = inlined_call_operand.hbm [shape: f32[2,32,32], index: 4, kind: output, shape index: {2}]
  %s5 = inlined_call_operand.hbm [shape: f32[2,1,32], index: 5, kind: output, shape index: {3}]
  %s6 = inlined_call_operand.hbm [shape: f32[2,1,32], index: 6, kind: output, shape index: {4}]
  %7 = xla_tuple %s2, %s3, %s4, %s5, %s6
  %s8 = sld [smem:[#allocation0]]
  $region77: #{tpu_custom_call.1} parent=0
    _
  %s10 = ssub.s32 1, %s8
  %s11 = scalar_select 0, %s10, %s8
  $region1: #{tpu_custom_call.1} parent=0
    #allocation2 [shape = 'u8[32768]{0}', space=vmem, size = 0x8000, scoped, tag = 'output window, operand 0']
    #allocation3 [shape = 's32[2]{0}', space=sflag, size = 0x8, scoped, tag = 'scoped memory for tpu_custom_call.1']
    #allocation4 [shape = 'u8[32768]{0}', space=vmem, size = 0x8000, scoped, tag = 'output window, operand 1']
    #allocation5 [shape = 's32[2]{0}', space=sflag, size = 0x8, scoped, tag = 'scoped memory for tpu_custom_call.1']
    #allocation6 [shape = 'u8[32768]{0}', space=vmem, size = 0x8000, scoped, tag = 'output window, operand 2']
    #allocation7 [shape = 'u8[1024]{0}', space=vmem, size = 0x400, scoped, tag = 'output window, operand 3']
    #allocation8 [shape = 's32[2]{0}', space=sflag, size = 0x8, scoped, tag = 'scoped memory for tpu_custom_call.1']
    #allocation9 [shape = 'u8[1024]{0}', space=vmem, size = 0x400, scoped, tag = 'output window, operand 4']
    %12 = vsyncpa [#allocation3], 0
    %s13 = scalar_lea.sflag [#allocation3], 1
    %14 = vsyncpa %s13, 0
    %15 = vsyncpa [#allocation5], 0
    %s16 = scalar_lea.sflag [#allocation5], 1
    %17 = vsyncpa %s16, 0
    %18 = vsyncpa [#allocation8], 0
    %s19 = scalar_lea.sflag [#allocation8], 1
    %20 = vsyncpa %s19, 0
    loop: start=0, step=1, limit=6
    $region2: #{tpu_custom_call.1} parent=1 // loop_pre_header
      _
    $region3: #{tpu_custom_call.1} parent=1 // loop_header
      %s22 = sphi 0, %s26
      %p23 = scmp.ge.s32.totalorder %s22, 6
      %s29 = sphi 0, %s41
      %s30 = sphi 0, %s37
      %s31 = sphi 0, %s29
      %s32 = sphi 0, %s30
      %s33 = sphi 0, %s31
      %s34 = sphi 0, %s32
      %s48 = sphi 0, %s50
      %s51 = sphi 0, %s48
      %s52 = sphi 0, %s51
      %s68 = sphi 0, %s52
      %s78 = sphi 0, %s80
      %s81 = sphi 0, %s78
      %s82 = sphi 0, %s81
      %s98 = sphi 0, %s82
      %s104 = sphi 0, %s106
      %s107 = sphi 0, %s104
      %s108 = sphi 0, %s107
      %s124 = sphi 0, %s108
      %s130 = sphi 0, %s132
      %s133 = sphi 0, %s130
      %s134 = sphi 0, %s133
      %s150 = sphi 0, %s134
      %s156 = sphi 0, %s158
      %s159 = sphi 0, %s156
      %s160 = sphi 0, %s159
      %s176 = sphi 0, %s160
      %s182 = sphi 0, %s184
      %s185 = sphi 0, %s182
      %s186 = sphi 0, %s185
      %s202 = sphi 0, %s186
      %s208 = sphi 0, %s210
      %s211 = sphi 0, %s208
      %s212 = sphi 0, %s211
      %s228 = sphi 0, %s212
    $region4: #{tpu_custom_call.1} parent=1 // loop_header_branch
      %25 = sbr.rel (%p23) target = $region8
    $region5: #{tpu_custom_call.1} parent=1 // loop_body
      %s27 = ssub.s32 %s22, 1
      %s28 = ssub.s32 %s22, 2
      %s35 = sadd.s32 1, %s30
      %p36 = scmp.ge.s32.totalorder %s35, 2
      %s37 = scalar_select %p36, 0, %s35
      %s38 = sadd.s32 1, %s29
      %s39 = scalar_select %p36, %s38, %s29
      %p40 = scmp.ge.s32.totalorder %s39, 2
      %s41 = scalar_select %p40, 0, %s39
      %s42 = smul.u32 %s29, 2
      %s43 = sadd.s32 %s42, %s30
      %s44 = smul.u32 %s41, 2
      %s45 = sadd.s32 %s44, %s37
      %s46 = ssub.s32 %s43, %s45
      %p47 = scmp.eq.s32.totalorder %s46, 0
      %s49 = sadd.s32 %s48, 1
      %s50 = scalar_select %p47, %s48, %s49
      %p53 = pneg %p47
      %p54 = scmp.eq.s32.totalorder %s22, 3
      %p55 = por %p53, %p54
      %p56 = scmp.ne.s32.totalorder %s48, %s51
      %p57 = scmp.eq.s32.totalorder %s22, 0
      %p58 = por %p56, %p57
      %p59 = scmp.ne.s32.totalorder %s48, %s51
      %p60 = scmp.eq.s32.totalorder %s27, 3
      %p61 = por %p59, %p60
      %p62 = scmp.ne.s32.totalorder %s51, %s52
      %p63 = scmp.eq.s32.totalorder %s27, 0
      %p64 = por %p62, %p63
      %p65 = scmp.ne.s32.totalorder %s51, %s52
      %p66 = scmp.eq.s32.totalorder %s28, 3
      %p67 = por %p65, %p66
      %p69 = scmp.ne.s32.totalorder %s52, %s68
      %p70 = scmp.eq.s32.totalorder %s28, 0
      %p71 = por %p69, %p70
      %s72 = smul.u32 %s29, 2
      %s73 = sadd.s32 %s72, %s30
      %s74 = smul.u32 %s41, 2
      %s75 = sadd.s32 %s74, %s37
      %s76 = ssub.s32 %s73, %s75
      %p77 = scmp.eq.s32.totalorder %s76, 0
      %s79 = sadd.s32 %s78, 1
      %s80 = scalar_select %p77, %s78, %s79
      %p83 = pneg %p77
      %p84 = scmp.eq.s32.totalorder %s22, 3
      %p85 = por %p83, %p84
      %p86 = scmp.ne.s32.totalorder %s78, %s81
      %p87 = scmp.eq.s32.totalorder %s22, 0
      %p88 = por %p86, %p87
      %p89 = scmp.ne.s32.totalorder %s78, %s81
      %p90 = scmp.eq.s32.totalorder %s27, 3
      %p91 = por %p89, %p90
      %p92 = scmp.ne.s32.totalorder %s81, %s82
      %p93 = scmp.eq.s32.totalorder %s27, 0
      %p94 = por %p92, %p93
      %p95 = scmp.ne.s32.totalorder %s81, %s82
      %p96 = scmp.eq.s32.totalorder %s28, 3
      %p97 = por %p95, %p96
      %p99 = scmp.ne.s32.totalorder %s82, %s98
      %p100 = scmp.eq.s32.totalorder %s28, 0
      %p101 = por %p99, %p100
      %s102 = ssub.s32 %s29, %s41
      %p103 = scmp.eq.s32.totalorder %s102, 0
      %s105 = sadd.s32 %s104, 1
      %s106 = scalar_select %p103, %s104, %s105
      %p109 = pneg %p103
      %p110 = scmp.eq.s32.totalorder %s22, 3
      %p111 = por %p109, %p110
      %p112 = scmp.ne.s32.totalorder %s104, %s107
      %p113 = scmp.eq.s32.totalorder %s22, 0
      %p114 = por %p112, %p113
      %p115 = scmp.ne.s32.totalorder %s104, %s107
      %p116 = scmp.eq.s32.totalorder %s27, 3
      %p117 = por %p115, %p116
      %p118 = scmp.ne.s32.totalorder %s107, %s108
      %p119 = scmp.eq.s32.totalorder %s27, 0
      %p120 = por %p118, %p119
      %p121 = scmp.ne.s32.totalorder %s107, %s108
      %p122 = scmp.eq.s32.totalorder %s28, 3
      %p123 = por %p121, %p122
      %p125 = scmp.ne.s32.totalorder %s108, %s124
      %p126 = scmp.eq.s32.totalorder %s28, 0
      %p127 = por %p125, %p126
      %s128 = ssub.s32 %s29, %s41
      %p129 = scmp.eq.s32.totalorder %s128, 0
      %s131 = sadd.s32 %s130, 1
      %s132 = scalar_select %p129, %s130, %s131
      %p135 = pneg %p129
      %p136 = scmp.eq.s32.totalorder %s22, 3
      %p137 = por %p135, %p136
      %p138 = scmp.ne.s32.totalorder %s130, %s133
      %p139 = scmp.eq.s32.totalorder %s22, 0
      %p140 = por %p138, %p139
      %p141 = scmp.ne.s32.totalorder %s130, %s133
      %p142 = scmp.eq.s32.totalorder %s27, 3
      %p143 = por %p141, %p142
      %p144 = scmp.ne.s32.totalorder %s133, %s134
      %p145 = scmp.eq.s32.totalorder %s27, 0
      %p146 = por %p144, %p145
      %p147 = scmp.ne.s32.totalorder %s133, %s134
      %p148 = scmp.eq.s32.totalorder %s28, 3
      %p149 = por %p147, %p148
      %p151 = scmp.ne.s32.totalorder %s134, %s150
      %p152 = scmp.eq.s32.totalorder %s28, 0
      %p153 = por %p151, %p152
      %s154 = ssub.s32 %s29, %s41
      %p155 = scmp.eq.s32.totalorder %s154, 0
      %s157 = sadd.s32 %s156, 1
      %s158 = scalar_select %p155, %s156, %s157
      %p161 = pneg %p155
      %p162 = scmp.eq.s32.totalorder %s22, 3
      %p163 = por %p161, %p162
      %p164 = scmp.ne.s32.totalorder %s156, %s159
      %p165 = scmp.eq.s32.totalorder %s22, 0
      %p166 = por %p164, %p165
      %p167 = scmp.ne.s32.totalorder %s156, %s159
      %p168 = scmp.eq.s32.totalorder %s27, 3
      %p169 = por %p167, %p168
      %p170 = scmp.ne.s32.totalorder %s159, %s160
      %p171 = scmp.eq.s32.totalorder %s27, 0
      %p172 = por %p170, %p171
      %p173 = scmp.ne.s32.totalorder %s159, %s160
      %p174 = scmp.eq.s32.totalorder %s28, 3
      %p175 = por %p173, %p174
      %p177 = scmp.ne.s32.totalorder %s160, %s176
      %p178 = scmp.eq.s32.totalorder %s28, 0
      %p179 = por %p177, %p178
      %s180 = ssub.s32 %s29, %s41
      %p181 = scmp.eq.s32.totalorder %s180, 0
      %s183 = sadd.s32 %s182, 1
      %s184 = scalar_select %p181, %s182, %s183
      %p187 = pneg %p181
      %p188 = scmp.eq.s32.totalorder %s22, 3
      %p189 = por %p187, %p188
      %p190 = scmp.ne.s32.totalorder %s182, %s185
      %p191 = scmp.eq.s32.totalorder %s22, 0
      %p192 = por %p190, %p191
      %p193 = scmp.ne.s32.totalorder %s182, %s185
      %p194 = scmp.eq.s32.totalorder %s27, 3
      %p195 = por %p193, %p194
      %p196 = scmp.ne.s32.totalorder %s185, %s186
      %p197 = scmp.eq.s32.totalorder %s27, 0
      %p198 = por %p196, %p197
      %p199 = scmp.ne.s32.totalorder %s185, %s186
      %p200 = scmp.eq.s32.totalorder %s28, 3
      %p201 = por %p199, %p200
      %p203 = scmp.ne.s32.totalorder %s186, %s202
      %p204 = scmp.eq.s32.totalorder %s28, 0
      %p205 = por %p203, %p204
      %s206 = ssub.s32 %s29, %s41
      %p207 = scmp.eq.s32.totalorder %s206, 0
      %s209 = sadd.s32 %s208, 1
      %s210 = scalar_select %p207, %s208, %s209
      %p213 = pneg %p207
      %p214 = scmp.eq.s32.totalorder %s22, 3
      %p215 = por %p213, %p214
      %p216 = scmp.ne.s32.totalorder %s208, %s211
      %p217 = scmp.eq.s32.totalorder %s22, 0
      %p218 = por %p216, %p217
      %p219 = scmp.ne.s32.totalorder %s208, %s211
      %p220 = scmp.eq.s32.totalorder %s27, 3
      %p221 = por %p219, %p220
      %p222 = scmp.ne.s32.totalorder %s211, %s212
      %p223 = scmp.eq.s32.totalorder %s27, 0
      %p224 = por %p222, %p223
      %p225 = scmp.ne.s32.totalorder %s211, %s212
      %p226 = scmp.eq.s32.totalorder %s28, 3
      %p227 = por %p225, %p226
      %p229 = scmp.ne.s32.totalorder %s212, %s228
      %p230 = scmp.eq.s32.totalorder %s28, 0
      %p231 = por %p229, %p230
      %p232 = scmp.le.s32.totalorder 1, %s22
      %p233 = scmp.lt.s32.totalorder %s22, 5
      %p234 = pnand %p232, %p233
      %p235 = pneg %p234
      // Predicated region
      $region9: #{tpu_custom_call.1} parent=5 // pred_check
        _
      $region10: #{tpu_custom_call.1} parent=5 // pred_check_branch
        %237 = sbr.rel (%p234) target = $region12
      $region11: #{tpu_custom_call.1} parent=5 // pred_region
        %s238 = ssub.s32 %s22, 1
      $region12: #{tpu_custom_call.1} parent=5 // pred_fallthru
        _
      %p239 = scmp.lt.s32.totalorder %s22, 4
      // Predicated region
      $region13: #{tpu_custom_call.1} parent=5 // pred_check
        %p240 = pneg %p239
      $region14: #{tpu_custom_call.1} parent=5 // pred_check_branch
        %242 = sbr.rel (%p240) target = $region16
      $region15: #{tpu_custom_call.1} parent=5 // pred_region
        // Predicated region
        $region17: #{tpu_custom_call.1} parent=15 // pred_check
          %p243 = pneg %p58
        $region18: #{tpu_custom_call.1} parent=15 // pred_check_branch
          %245 = sbr.rel (%p243) target = $region20
        $region19: #{tpu_custom_call.1} parent=15 // pred_region
          %s246 = smul.u32 %s29, 2
          %s247 = sadd.s32 %s246, %s30
          %s248 = smul.u32 8, %s247
          %p249 = scmp.lt.s32.totalorder %s248, 31
          %s250 = scalar_select %p249, %s248, 31
          %s251 = smul.addr %s250, 8
          %s252 = scalar_lea.vmem %s0, %s251
          %s253 = smul.u32 %s29, 2
          %s254 = sadd.s32 %s253, %s30
          %s255 = smul.u32 8, %s254
        $region20: #{tpu_custom_call.1} parent=15 // pred_fallthru
          _
        // Predicated region
        $region21: #{tpu_custom_call.1} parent=15 // pred_check
          %p256 = pneg %p88
        $region22: #{tpu_custom_call.1} parent=15 // pred_check_branch
          %258 = sbr.rel (%p256) target = $region24
        $region23: #{tpu_custom_call.1} parent=15 // pred_region
          %s259 = smul.u32 %s29, 2
          %s260 = sadd.s32 %s259, %s30
          %s261 = smul.u32 8, %s260
          %p262 = scmp.lt.s32.totalorder %s261, 31
          %s263 = scalar_select %p262, %s261, 31
          %s264 = smul.addr %s263, 8
          %s265 = scalar_lea.vmem %s1, %s264
          %s266 = smul.u32 %s29, 2
          %s267 = sadd.s32 %s266, %s30
          %s268 = smul.u32 8, %s267
        $region24: #{tpu_custom_call.1} parent=15 // pred_fallthru
          _
      $region16: #{tpu_custom_call.1} parent=5 // pred_fallthru
        _
      %p269 = scmp.le.s32.totalorder 1, %s22
      %p270 = scmp.lt.s32.totalorder %s22, 5
      %p271 = pnand %p269, %p270
      %p272 = pneg %p271
      // Predicated region
      $region25: #{tpu_custom_call.1} parent=5 // pred_check
        _
      $region26: #{tpu_custom_call.1} parent=5 // pred_check_branch
        %274 = sbr.rel (%p271) target = $region28
      $region27: #{tpu_custom_call.1} parent=5 // pred_region
        %s275 = ssub.s32 %s22, 1
        %s276 = smul.u32 %s31, 2
        %s277 = sadd.s32 %s276, %s32
        %s278 = smul.u32 8, %s277
        %p279 = scmp.lt.s32.totalorder %s278, 31
        %s280 = scalar_select %p279, %s278, 31
        %s281 = smul.addr %s280, 8
        %s282 = scalar_lea.vmem %s0, %s281
        %p283 = pneg %p64
        %p284 = pneg %p61
        %s285 = smul.u32 %s31, 2
        %s286 = sadd.s32 %s285, %s32
        %s287 = smul.u32 8, %s286
        %p288 = scmp.lt.s32.totalorder %s287, 31
        %s289 = scalar_select %p288, %s287, 31
        %s290 = smul.addr %s289, 8
        %s291 = scalar_lea.vmem %s1, %s290
        %p292 = pneg %p94
        %p293 = pneg %p91
        %p294 = pneg %p120
        %p295 = pneg %p117
        %s296 = sand.u32 %s107, 1
        %s297 = scalar_lea.sflag [#allocation3], %s296
        %s298 = sand.u32 %s107, 1
        %s299 = smul.addr %s298, 32
        %s300 = scalar_lea.vmem [#allocation2], %s299
        %p301 = pneg %p146
        %p302 = pneg %p143
        %s303 = sand.u32 %s27, 1
        %s304 = scalar_lea.sflag [#allocation5], %s303
        %s305 = sand.u32 %s133, 1
        %s306 = smul.addr %s305, 32
        %s307 = scalar_lea.vmem [#allocation4], %s306
        %p308 = pneg %p172
        %p309 = pneg %p169
        %s310 = sand.u32 %s27, 1
        %s311 = scalar_lea.sflag [#allocation5], %s310
        %s312 = sand.u32 %s159, 1
        %s313 = smul.addr %s312, 32
        %s314 = scalar_lea.vmem [#allocation6], %s313
        %p315 = pneg %p198
        %p316 = pneg %p195
        %s317 = sand.u32 %s27, 1
        %s318 = scalar_lea.sflag [#allocation8], %s317
        %s319 = sand.u32 %s185, 1
        %s320 = scalar_lea.vmem [#allocation7], %s319
        %p321 = pneg %p224
        %p322 = pneg %p221
        %s323 = sand.u32 %s27, 1
        %s324 = scalar_lea.sflag [#allocation8], %s323
        %s325 = sand.u32 %s211, 1
        %s326 = scalar_lea.vmem [#allocation9], %s325
        %s327 = smul.u32 %s31, 2
        %s328 = sadd.s32 %s327, %s32
        %s329 = smul.u32 8, %s328
        %p330 = scmp.lt.s32.totalorder %s329, 31
        %s331 = scalar_select %p330, %s329, 31
        %s332 = smul.addr %s331, 8
        %s333 = scalar_lea.vmem %s0, %s332
        %s334 = smul.u32 %s31, 2
        %s335 = sadd.s32 %s334, %s32
        %s336 = smul.u32 8, %s335
        %s337 = smul.u32 %s31, 2
        %s338 = sadd.s32 %s337, %s32
        %s339 = smul.u32 8, %s338
        %p340 = scmp.lt.s32.totalorder %s339, 31
        %s341 = scalar_select %p340, %s339, 31
        %s342 = smul.addr %s341, 8
        %s343 = scalar_lea.vmem %s1, %s342
        %s344 = smul.u32 %s31, 2
        %s345 = sadd.s32 %s344, %s32
        %s346 = smul.u32 8, %s345
        %p347 = scmp.eq.s32.totalorder %s32, 0
        // Predicated region
        $region29: #{tpu_custom_call.1} parent=27 // pred_check
          %p348 = pneg %p347
        $region30: #{tpu_custom_call.1} parent=27 // pred_check_branch
          %350 = sbr.rel (%p348) target = $region32
        $region31: #{tpu_custom_call.1} parent=27 // pred_region
          %vm351 = vcmask 261120
          %352 = vst.msk [vmem:[%s300] sm:$0xff] %vm351, 0.0
          %353 = vst.msk [vmem:[%s300 + $0x8] sm:$0xff] %vm351, 0.0
          %354 = vst.msk [vmem:[%s300 + $0x10] sm:$0xff] %vm351, 0.0
          %355 = vst.msk [vmem:[%s300 + $0x18] sm:$0xff] %vm351, 0.0
          %356 = vst.msk [vmem:[%s307] sm:$0xff] %vm351, 0.0
          %357 = vst.msk [vmem:[%s307 + $0x8] sm:$0xff] %vm351, 0.0
          %358 = vst.msk [vmem:[%s307 + $0x10] sm:$0xff] %vm351, 0.0
          %359 = vst.msk [vmem:[%s307 + $0x18] sm:$0xff] %vm351, 0.0
          %360 = vst.msk [vmem:[%s314] sm:$0xff] %vm351, 0.0
          %361 = vst.msk [vmem:[%s314 + $0x8] sm:$0xff] %vm351, 0.0
          %362 = vst.msk [vmem:[%s314 + $0x10] sm:$0xff] %vm351, 0.0
          %363 = vst.msk [vmem:[%s314 + $0x18] sm:$0xff] %vm351, 0.0
          %vm364 = vcmask 253952
          %365 = vst.msk [vmem:[%s320] sm:$0x1] %vm364, 0.0
          %366 = vst.msk [vmem:[%s326] sm:$0x1] %vm364, 0.0
        $region32: #{tpu_custom_call.1} parent=27 // pred_fallthru
          _
        %v367 = vld [vmem:[%s333] sm:$0xff]
        %v368 = vld [vmem:[%s333 + $0x8] sm:$0xff]
        %v369 = vld [vmem:[%s333 + $0x10] sm:$0xff]
        %v370 = vld [vmem:[%s333 + $0x18] sm:$0xff]
        %v371 = vld [vmem:[%s333 + $0x20] sm:$0xff]
        %v372 = vld [vmem:[%s333 + $0x28] sm:$0xff]
        %v373 = vld [vmem:[%s333 + $0x30] sm:$0xff]
        %v374 = vld [vmem:[%s333 + $0x38] sm:$0xff]
        %v375 = vld [vmem:[%s343] sm:$0xff]
        %v376 = vld [vmem:[%s343 + $0x8] sm:$0xff]
        %v377 = vld [vmem:[%s343 + $0x10] sm:$0xff]
        %v378 = vld [vmem:[%s343 + $0x18] sm:$0xff]
        %v379 = vld [vmem:[%s343 + $0x20] sm:$0xff]
        %v380 = vld [vmem:[%s343 + $0x28] sm:$0xff]
        %v381 = vld [vmem:[%s343 + $0x30] sm:$0xff]
        %v382 = vld [vmem:[%s343 + $0x38] sm:$0xff]
        %v383 = vld [vmem:[%s300] sm:$0xff]
        %v384 = vld [vmem:[%s300 + $0x8] sm:$0xff]
        %v385 = vld [vmem:[%s300 + $0x10] sm:$0xff]
        %v386 = vld [vmem:[%s300 + $0x18] sm:$0xff]
        %387 = vxpose.xlu0.b32.start [1/16] %v367, 128
        %388 = vxpose.xlu0.b32.cont [2/16] %v368, 128
        %389 = vxpose.xlu0.b32.cont [3/16] %v369, 128
        %390 = vxpose.xlu0.b32.cont [4/16] %v370, 128
        %391 = vxpose.xlu0.b32.cont [5/16] %v371, 128
        %392 = vxpose.xlu0.b32.cont [6/16] %v372, 128
        %393 = vxpose.xlu0.b32.cont [7/16] %v373, 128
        %394 = vxpose.xlu0.b32.cont [8/16] %v374, 128
        %395 = vxpose.xlu0.b32.cont [9/16] 0.0, 128
        %396 = vxpose.xlu0.b32.cont [10/16] 0.0, 128
        %397 = vxpose.xlu0.b32.cont [11/16] 0.0, 128
        %398 = vxpose.xlu0.b32.cont [12/16] 0.0, 128
        %399 = vxpose.xlu0.b32.cont [13/16] 0.0, 128
        %400 = vxpose.xlu0.b32.cont [14/16] 0.0, 128
        %401 = vxpose.xlu0.b32.cont [15/16] 0.0, 128
        %402 = vxpose.xlu0.b32.end [16/16] 0.0, 128
        %v403 = vpop.trf.xlu0
        %v404 = vpop.trf.xlu0
        %v405 = vpop.trf.xlu0
        %v406 = vpop.trf.xlu0
        %v407 = vpop.trf.xlu0
        %v408 = vpop.trf.xlu0
        %v409 = vpop.trf.xlu0
        %v410 = vpop.trf.xlu0
        %v411 = vpop.trf.xlu0
        %v412 = vpop.trf.xlu0
        %v413 = vpop.trf.xlu0
        %v414 = vpop.trf.xlu0
        %v415 = vpop.trf.xlu0
        %v416 = vpop.trf.xlu0
        %v417 = vpop.trf.xlu0
        %v418 = vpop.trf.xlu0
        %vm419 = vcmask 523264
        %v421 = vsel %vm419, %v403, 0
        %v424 = vsel %vm419, %v404, 0
        %v427 = vsel %vm419, %v405, 0
        %v430 = vsel %vm419, %v406, 0
        %432 = vmatpush.msra.mxu0 0.0
        %433 = vmatpush.msra.mxu0 0.0
        %434 = vmatpush.msra.mxu0 0.0
        %435 = vmatpush.msra.mxu0 0.0
        %436 = vmatpush.msra.mxu0 0.0
        %437 = vmatpush.msra.mxu0 0.0
        %438 = vmatpush.msra.mxu0 0.0
        %439 = vmatpush.msra.mxu0 0.0
        %440 = vmatpush.msra.mxu0 %v374
        %441 = vmatpush.msra.mxu0 %v373
        %442 = vmatpush.msra.mxu0 %v372
        %443 = vmatpush.msra.mxu0 %v371
        %444 = vmatpush.msra.mxu0 %v370
        %445 = vmatpush.msra.mxu0 %v369
        %446 = vmatpush.msra.mxu0 %v368
        %447 = vmatpush.msra.mxu0 %v367
        %448 = vmatmul.f32.gmra.mxu0 %v421
        %v449 = vpop.f32.mrf.mxu0
        %v450 = vadd.f32 0.0, %v449
        %451 = vmatmul.f32.gmra.mxu0 %v424
        %v452 = vpop.f32.mrf.mxu0
        %v453 = vadd.f32 0.0, %v452
        %454 = vmatmul.f32.gmra.mxu0 %v427
        %v455 = vpop.f32.mrf.mxu0
        %v456 = vadd.f32 0.0, %v455
        %457 = vmatmul.f32.gmra.mxu0 %v430
        %v458 = vpop.f32.mrf.mxu0
        %v459 = vadd.f32 0.0, %v458
        %460 = vdwg.mxu0
        %v461 = vadd.f32 %v383, %v450
        %v462 = vadd.f32 %v384, %v453
        %v463 = vadd.f32 %v385, %v456
        %v464 = vadd.f32 %v386, %v459
        %vm465 = vcmask 261120
        %466 = vst.msk [vmem:[%s300] sm:$0xff] %vm465, %v461
        %467 = vst.msk [vmem:[%s300 + $0x8] sm:$0xff] %vm465, %v462
        %468 = vst.msk [vmem:[%s300 + $0x10] sm:$0xff] %vm465, %v463
        %469 = vst.msk [vmem:[%s300 + $0x18] sm:$0xff] %vm465, %v464
        %v470 = vld [vmem:[%s307] sm:$0xff]
        %v471 = vld [vmem:[%s307 + $0x8] sm:$0xff]
        %v472 = vld [vmem:[%s307 + $0x10] sm:$0xff]
        %v473 = vld [vmem:[%s307 + $0x18] sm:$0xff]
        %474 = vxpose.xlu0.b32.start [1/16] %v375, 128
        %475 = vxpose.xlu0.b32.cont [2/16] %v376, 128
        %476 = vxpose.xlu0.b32.cont [3/16] %v377, 128
        %477 = vxpose.xlu0.b32.cont [4/16] %v378, 128
        %478 = vxpose.xlu0.b32.cont [5/16] %v379, 128
        %479 = vxpose.xlu0.b32.cont [6/16] %v380, 128
        %480 = vxpose.xlu0.b32.cont [7/16] %v381, 128
        %481 = vxpose.xlu0.b32.cont [8/16] %v382, 128
        %482 = vxpose.xlu0.b32.cont [9/16] 0.0, 128
        %483 = vxpose.xlu0.b32.cont [10/16] 0.0, 128
        %484 = vxpose.xlu0.b32.cont [11/16] 0.0, 128
        %485 = vxpose.xlu0.b32.cont [12/16] 0.0, 128
        %486 = vxpose.xlu0.b32.cont [13/16] 0.0, 128
        %487 = vxpose.xlu0.b32.cont [14/16] 0.0, 128
        %488 = vxpose.xlu0.b32.cont [15/16] 0.0, 128
        %489 = vxpose.xlu0.b32.end [16/16] 0.0, 128
        %v490 = vpop.trf.xlu0
        %v491 = vpop.trf.xlu0
        %v492 = vpop.trf.xlu0
        %v493 = vpop.trf.xlu0
        %v494 = vpop.trf.xlu0
        %v495 = vpop.trf.xlu0
        %v496 = vpop.trf.xlu0
        %v497 = vpop.trf.xlu0
        %v498 = vpop.trf.xlu0
        %v499 = vpop.trf.xlu0
        %v500 = vpop.trf.xlu0
        %v501 = vpop.trf.xlu0
        %v502 = vpop.trf.xlu0
        %v503 = vpop.trf.xlu0
        %v504 = vpop.trf.xlu0
        %v505 = vpop.trf.xlu0
        %v507 = vsel %vm419, %v490, 0
        %v510 = vsel %vm419, %v491, 0
        %v513 = vsel %vm419, %v492, 0
        %v516 = vsel %vm419, %v493, 0
        %518 = vmatpush.msra.mxu0 0.0
        %519 = vmatpush.msra.mxu0 0.0
        %520 = vmatpush.msra.mxu0 0.0
        %521 = vmatpush.msra.mxu0 0.0
        %522 = vmatpush.msra.mxu0 0.0
        %523 = vmatpush.msra.mxu0 0.0
        %524 = vmatpush.msra.mxu0 0.0
        %525 = vmatpush.msra.mxu0 0.0
        %526 = vmatpush.msra.mxu0 %v382
        %527 = vmatpush.msra.mxu0 %v381
        %528 = vmatpush.msra.mxu0 %v380
        %529 = vmatpush.msra.mxu0 %v379
        %530 = vmatpush.msra.mxu0 %v378
        %531 = vmatpush.msra.mxu0 %v377
        %532 = vmatpush.msra.mxu0 %v376
        %533 = vmatpush.msra.mxu0 %v375
        %534 = vmatmul.f32.gmra.mxu0 %v507
        %v535 = vpop.f32.mrf.mxu0
        %v536 = vadd.f32 0.0, %v535
        %537 = vmatmul.f32.gmra.mxu0 %v510
        %v538 = vpop.f32.mrf.mxu0
        %v539 = vadd.f32 0.0, %v538
        %540 = vmatmul.f32.gmra.mxu0 %v513
        %v541 = vpop.f32.mrf.mxu0
        %v542 = vadd.f32 0.0, %v541
        %543 = vmatmul.f32.gmra.mxu0 %v516
        %v544 = vpop.f32.mrf.mxu0
        %v545 = vadd.f32 0.0, %v544
        %546 = vdwg.mxu0
        %v547 = vadd.f32 %v470, %v536
        %v548 = vadd.f32 %v471, %v539
        %v549 = vadd.f32 %v472, %v542
        %v550 = vadd.f32 %v473, %v545
        %551 = vst.msk [vmem:[%s307] sm:$0xff] %vm465, %v547
        %552 = vst.msk [vmem:[%s307 + $0x8] sm:$0xff] %vm465, %v548
        %553 = vst.msk [vmem:[%s307 + $0x10] sm:$0xff] %vm465, %v549
        %554 = vst.msk [vmem:[%s307 + $0x18] sm:$0xff] %vm465, %v550
        %v555 = vld [vmem:[%s314] sm:$0xff]
        %v556 = vld [vmem:[%s314 + $0x8] sm:$0xff]
        %v557 = vld [vmem:[%s314 + $0x10] sm:$0xff]
        %v558 = vld [vmem:[%s314 + $0x18] sm:$0xff]
        %559 = vmatpush.msra.mxu0 0.0
        %560 = vmatpush.msra.mxu0 0.0
        %561 = vmatpush.msra.mxu0 0.0
        %562 = vmatpush.msra.mxu0 0.0
        %563 = vmatpush.msra.mxu0 0.0
        %564 = vmatpush.msra.mxu0 0.0
        %565 = vmatpush.msra.mxu0 0.0
        %566 = vmatpush.msra.mxu0 0.0
        %567 = vmatpush.msra.mxu0 %v382
        %568 = vmatpush.msra.mxu0 %v381
        %569 = vmatpush.msra.mxu0 %v380
        %570 = vmatpush.msra.mxu0 %v379
        %571 = vmatpush.msra.mxu0 %v378
        %572 = vmatpush.msra.mxu0 %v377
        %573 = vmatpush.msra.mxu0 %v376
        %574 = vmatpush.msra.mxu0 %v375
        %575 = vmatmul.f32.gmra.mxu0 %v421
        %v576 = vpop.f32.mrf.mxu0
        %v577 = vadd.f32 0.0, %v576
        %578 = vmatmul.f32.gmra.mxu0 %v424
        %v579 = vpop.f32.mrf.mxu0
        %v580 = vadd.f32 0.0, %v579
        %581 = vmatmul.f32.gmra.mxu0 %v427
        %v582 = vpop.f32.mrf.mxu0
        %v583 = vadd.f32 0.0, %v582
        %584 = vmatmul.f32.gmra.mxu0 %v430
        %v585 = vpop.f32.mrf.mxu0
        %v586 = vadd.f32 0.0, %v585
        %587 = vdwg.mxu0
        %v588 = vadd.f32 %v555, %v577
        %v589 = vadd.f32 %v556, %v580
        %v590 = vadd.f32 %v557, %v583
        %v591 = vadd.f32 %v558, %v586
        %592 = vst.msk [vmem:[%s314] sm:$0xff] %vm465, %v588
        %593 = vst.msk [vmem:[%s314 + $0x8] sm:$0xff] %vm465, %v589
        %594 = vst.msk [vmem:[%s314 + $0x10] sm:$0xff] %vm465, %v590
        %595 = vst.msk [vmem:[%s314 + $0x18] sm:$0xff] %vm465, %v591
        %v596 = vld [vmem:[%s320] sm:$0x1]
        %v597 = vsel %vm465, %v367, 0.0
        %v598 = vsel %vm465, %v368, 0.0
        %v599 = vadd.f32 %v597, %v598
        %v600 = vsel %vm465, %v369, 0.0
        %v601 = vadd.f32 %v599, %v600
        %v602 = vsel %vm465, %v370, 0.0
        %v603 = vadd.f32 %v601, %v602
        %v604 = vsel %vm465, %v371, 0.0
        %v605 = vadd.f32 %v603, %v604
        %v606 = vsel %vm465, %v372, 0.0
        %v607 = vadd.f32 %v605, %v606
        %v608 = vsel %vm465, %v373, 0.0
        %v609 = vadd.f32 %v607, %v608
        %v610 = vsel %vm465, %v374, 0.0
        %v611 = vadd.f32 %v609, %v610
        %v612 = vrot.slane %v611, 4
        %v613 = vadd.f32 %v611, %v612
        %v614 = vrot.slane %v613, 2
        %v615 = vadd.f32 %v613, %v614
        %v616 = vrot.slane %v615, 1
        %v617 = vadd.f32 %v615, %v616
        %v618 = vadd.f32 %v596, %v617
        %vm619 = vcmask 253952
        %620 = vst.msk [vmem:[%s320] sm:$0x1] %vm619, %v618
        %v621 = vld [vmem:[%s326] sm:$0x1]
        %v622 = vsel %vm465, %v375, 0.0
        %v623 = vsel %vm465, %v376, 0.0
        %v624 = vadd.f32 %v622, %v623
        %v625 = vsel %vm465, %v377, 0.0
        %v626 = vadd.f32 %v624, %v625
        %v627 = vsel %vm465, %v378, 0.0
        %v628 = vadd.f32 %v626, %v627
        %v629 = vsel %vm465, %v379, 0.0
        %v630 = vadd.f32 %v628, %v629
        %v631 = vsel %vm465, %v380, 0.0
        %v632 = vadd.f32 %v630, %v631
        %v633 = vsel %vm465, %v381, 0.0
        %v634 = vadd.f32 %v632, %v633
        %v635 = vsel %vm465, %v382, 0.0
        %v636 = vadd.f32 %v634, %v635
        %v637 = vrot.slane %v636, 4
        %v638 = vadd.f32 %v636, %v637
        %v639 = vrot.slane %v638, 2
        %v640 = vadd.f32 %v638, %v639
        %v641 = vrot.slane %v640, 1
        %v642 = vadd.f32 %v640, %v641
        %v643 = vadd.f32 %v621, %v642
        %644 = vst.msk [vmem:[%s326] sm:$0x1] %vm619, %v643
        %s645 = sand.u32 %s107, 1
        %s646 = scalar_lea.sflag [#allocation3], %s645
        %s647 = sand.u32 %s107, 1
        %s648 = smul.addr %s647, 32
        %s649 = scalar_lea.vmem [#allocation2], %s648
        %s650 = sand.u32 %s27, 1
        %s651 = scalar_lea.sflag [#allocation5], %s650
        %s652 = sand.u32 %s133, 1
        %s653 = smul.addr %s652, 32
        %s654 = scalar_lea.vmem [#allocation4], %s653
        %s655 = sand.u32 %s27, 1
        %s656 = scalar_lea.sflag [#allocation5], %s655
        %s657 = sand.u32 %s159, 1
        %s658 = smul.addr %s657, 32
        %s659 = scalar_lea.vmem [#allocation6], %s658
        %s660 = sand.u32 %s27, 1
        %s661 = scalar_lea.sflag [#allocation8], %s660
        %s662 = sand.u32 %s185, 1
        %s663 = scalar_lea.vmem [#allocation7], %s662
        %s664 = sand.u32 %s27, 1
        %s665 = scalar_lea.sflag [#allocation8], %s664
        %s666 = sand.u32 %s211, 1
        %s667 = scalar_lea.vmem [#allocation9], %s666
        // Predicated region
        $region33: #{tpu_custom_call.1} parent=27 // pred_check
          %p668 = pneg %p117
        $region34: #{tpu_custom_call.1} parent=27 // pred_check_branch
          %670 = sbr.rel (%p668) target = $region36
        $region35: #{tpu_custom_call.1} parent=27 // pred_region
          %672 = vsyncadd %s646, 0
          %s673 = smul.addr %s31, 4
          %s674 = smul.addr %s673, 8
          %s675 = scalar_lea.hbm %s2, %s674
          %s676 = sshll.u32 %s649, 4
          %s677 = int_to_ptr.vmem [resolvable:$true] %s676
          %s678 = sshll.u32 %s675, 4
          %s679 = int_to_ptr.hbm [resolvable:$true] %s678
          %684 = dma.vmem_to_hbm [thread:$0]  %s677, 512, %s679, %s646, 128, 128, 8
        $region36: #{tpu_custom_call.1} parent=27 // pred_fallthru
          _
        // Predicated region
        $region37: #{tpu_custom_call.1} parent=27 // pred_check
          %p685 = pneg %p143
        $region38: #{tpu_custom_call.1} parent=27 // pred_check_branch
          %687 = sbr.rel (%p685) target = $region40
        $region39: #{tpu_custom_call.1} parent=27 // pred_region
          %689 = vsyncadd %s651, 0
          %s690 = smul.addr %s31, 4
          %s691 = smul.addr %s690, 8
          %s692 = scalar_lea.hbm %s3, %s691
          %s693 = sshll.u32 %s654, 4
          %s694 = int_to_ptr.vmem [resolvable:$true] %s693
          %s695 = sshll.u32 %s692, 4
          %s696 = int_to_ptr.hbm [resolvable:$true] %s695
          %701 = dma.vmem_to_hbm [thread:$0]  %s694, 512, %s696, %s651, 128, 128, 8
        $region40: #{tpu_custom_call.1} parent=27 // pred_fallthru
          _
        // Predicated region
        $region41: #{tpu_custom_call.1} parent=27 // pred_check
          %p702 = pneg %p169
        $region42: #{tpu_custom_call.1} parent=27 // pred_check_branch
          %704 = sbr.rel (%p702) target = $region44
        $region43: #{tpu_custom_call.1} parent=27 // pred_region
          %706 = vsyncadd %s656, 0
          %s707 = smul.addr %s31, 4
          %s708 = smul.addr %s707, 8
          %s709 = scalar_lea.hbm %s4, %s708
          %s710 = sshll.u32 %s659, 4
          %s711 = int_to_ptr.vmem [resolvable:$true] %s710
          %s712 = sshll.u32 %s709, 4
          %s713 = int_to_ptr.hbm [resolvable:$true] %s712
          %718 = dma.vmem_to_hbm [thread:$0]  %s711, 512, %s713, %s656, 128, 128, 8
        $region44: #{tpu_custom_call.1} parent=27 // pred_fallthru
          _
        // Predicated region
        $region45: #{tpu_custom_call.1} parent=27 // pred_check
          %p719 = pneg %p195
        $region46: #{tpu_custom_call.1} parent=27 // pred_check_branch
          %721 = sbr.rel (%p719) target = $region48
        $region47: #{tpu_custom_call.1} parent=27 // pred_region
          %723 = vsyncadd %s661, 0
          %s724 = scalar_lea.hbm %s5, %s31
          %s726 = sshll.u32 %s663, 4
          %s727 = int_to_ptr.vmem [resolvable:$true] %s726
          %s728 = sshll.u32 %s724, 4
          %s729 = int_to_ptr.hbm [resolvable:$true] %s728
          %731 = dma.vmem_to_hbm [thread:$0]  %s727, 16, %s729, %s661
        $region48: #{tpu_custom_call.1} parent=27 // pred_fallthru
          _
        // Predicated region
        $region49: #{tpu_custom_call.1} parent=27 // pred_check
          %p732 = pneg %p221
        $region50: #{tpu_custom_call.1} parent=27 // pred_check_branch
          %734 = sbr.rel (%p732) target = $region52
        $region51: #{tpu_custom_call.1} parent=27 // pred_region
          %736 = vsyncadd %s665, 0
          %s737 = scalar_lea.hbm %s6, %s31
          %s739 = sshll.u32 %s667, 4
          %s740 = int_to_ptr.vmem [resolvable:$true] %s739
          %s741 = sshll.u32 %s737, 4
          %s742 = int_to_ptr.hbm [resolvable:$true] %s741
          %744 = dma.vmem_to_hbm [thread:$0]  %s740, 16, %s742, %s665
        $region52: #{tpu_custom_call.1} parent=27 // pred_fallthru
          _
      $region28: #{tpu_custom_call.1} parent=5 // pred_fallthru
        _
      %p745 = scmp.le.s32.totalorder 2, %s22
      // Predicated region
      $region53: #{tpu_custom_call.1} parent=5 // pred_check
        %p746 = pneg %p745
      $region54: #{tpu_custom_call.1} parent=5 // pred_check_branch
        %748 = sbr.rel (%p746) target = $region56
      $region55: #{tpu_custom_call.1} parent=5 // pred_region
        %s749 = ssub.s32 %s22, 2
        // Predicated region
        $region57: #{tpu_custom_call.1} parent=55 // pred_check
          %p750 = pneg %p123
        $region58: #{tpu_custom_call.1} parent=55 // pred_check_branch
          %752 = sbr.rel (%p750) target = $region60
        $region59: #{tpu_custom_call.1} parent=55 // pred_region
          %s753 = sand.u32 %s108, 1
          %s754 = scalar_lea.sflag [#allocation3], %s753
          %s755 = sand.u32 %s108, 1
          %s756 = smul.addr %s755, 32
          %s757 = scalar_lea.vmem [#allocation2], %s756
          %759 = dma.done %s754, 512
        $region60: #{tpu_custom_call.1} parent=55 // pred_fallthru
          _
        // Predicated region
        $region61: #{tpu_custom_call.1} parent=55 // pred_check
          %p760 = pneg %p149
        $region62: #{tpu_custom_call.1} parent=55 // pred_check_branch
          %762 = sbr.rel (%p760) target = $region64
        $region63: #{tpu_custom_call.1} parent=55 // pred_region
          %s763 = sand.u32 %s28, 1
          %s764 = scalar_lea.sflag [#allocation5], %s763
          %s765 = sand.u32 %s134, 1
          %s766 = smul.addr %s765, 32
          %s767 = scalar_lea.vmem [#allocation4], %s766
          %769 = dma.done %s764, 512
        $region64: #{tpu_custom_call.1} parent=55 // pred_fallthru
          _
        // Predicated region
        $region65: #{tpu_custom_call.1} parent=55 // pred_check
          %p770 = pneg %p175
        $region66: #{tpu_custom_call.1} parent=55 // pred_check_branch
          %772 = sbr.rel (%p770) target = $region68
        $region67: #{tpu_custom_call.1} parent=55 // pred_region
          %s773 = sand.u32 %s28, 1
          %s774 = scalar_lea.sflag [#allocation5], %s773
          %s775 = sand.u32 %s160, 1
          %s776 = smul.addr %s775, 32
          %s777 = scalar_lea.vmem [#allocation6], %s776
          %779 = dma.done %s774, 512
        $region68: #{tpu_custom_call.1} parent=55 // pred_fallthru
          _
        // Predicated region
        $region69: #{tpu_custom_call.1} parent=55 // pred_check
          %p780 = pneg %p201
        $region70: #{tpu_custom_call.1} parent=55 // pred_check_branch
          %782 = sbr.rel (%p780) target = $region72
        $region71: #{tpu_custom_call.1} parent=55 // pred_region
          %s783 = sand.u32 %s28, 1
          %s784 = scalar_lea.sflag [#allocation8], %s783
          %s785 = sand.u32 %s186, 1
          %s786 = scalar_lea.vmem [#allocation7], %s785
          %788 = dma.done %s784, 16
        $region72: #{tpu_custom_call.1} parent=55 // pred_fallthru
          _
        // Predicated region
        $region73: #{tpu_custom_call.1} parent=55 // pred_check
          %p789 = pneg %p227
        $region74: #{tpu_custom_call.1} parent=55 // pred_check_branch
          %791 = sbr.rel (%p789) target = $region76
        $region75: #{tpu_custom_call.1} parent=55 // pred_region
          %s792 = sand.u32 %s28, 1
          %s793 = scalar_lea.sflag [#allocation8], %s792
          %s794 = sand.u32 %s212, 1
          %s795 = scalar_lea.vmem [#allocation9], %s794
          %797 = dma.done %s793, 16
        $region76: #{tpu_custom_call.1} parent=55 // pred_fallthru
          _
      $region56: #{tpu_custom_call.1} parent=5 // pred_fallthru
        _
    $region6: #{tpu_custom_call.1} parent=1 // loop_footer
      %s26 = sadd.s32 1, %s22
    $region7: #{tpu_custom_call.1} parent=1 // loop_footer_branch
      %21 = sbr.rel target = $region3
    $region8: #{tpu_custom_call.1} parent=1 // loop_exit
      _
    %798 = vsyncpa [#allocation3], 1
    %s799 = scalar_lea.sflag [#allocation3], 1
    %800 = vsyncpa %s799, 1
    %801 = vsyncpa [#allocation5], 1
    %s802 = scalar_lea.sflag [#allocation5], 1
    %803 = vsyncpa %s802, 1
    %804 = vsyncpa [#allocation8], 1
    %s805 = scalar_lea.sflag [#allocation8], 1
    %806 = vsyncpa %s805, 1

</llo_original>
